<compile_context>
chip_gen: v5e
topology: v5e:2x2
jax: 0.10.0
libtpu: 0.0.40
codegen_flags: <defaults>
</compile_context>

<pallas_src>
import jax
import jax.numpy as jnp
from jax.experimental import pallas as pl
from jax.experimental.pallas import tpu as pltpu


def gcn_score_kernel(at_ref, y2_ref, dinv_ref, b_ref, o_ref, acc_ref):
    """One (row-tile, k-tile) step of score = D^-1/2 (A+I) D^-1/2 (X W) + b.

    at_ref   : [KC, TM] int8  streamed tile of (A + I)^T counts
    y2_ref   : [2, KC]  bf16  hi/lo split of D^-1/2 (X @ W)   (lane-dense)
    dinv_ref : [1, TM]  f32   per-output-row D^-1/2           (lane-dense)
    b_ref    : [1]      f32   bias (SMEM)
    o_ref    : [1, TM]  f32   output scores                   (lane-dense)
    acc_ref  : [1, TM]  f32   VMEM accumulator across the k axis
    """
    k = pl.program_id(1)

    @pl.when(k == 0)
    def _():
        acc_ref[...] = jnp.zeros_like(acc_ref)

    # Per-vreg VPU upcast of the int8 tile feeding a native-bf16 MXU matmul
    # (no full-tile f32 copy; v7x has no integer MXU so bf16 is the target).
    a = at_ref[...].astype(jnp.bfloat16)                                # [KC, TM]
    part = jnp.dot(y2_ref[...], a, preferred_element_type=jnp.float32)  # [2, TM] f32
    acc_ref[...] += part[0:1, :] + part[1:2, :]   # recombine hi + lo contributions

    @pl.when(k == pl.num_programs(1) - 1)
    def _():
        o_ref[...] = (dinv_ref[...] * acc_ref[...] + b_ref[0]).astype(o_ref.dtype)


def _round_up(x, m):
    return ((x + m - 1) // m) * m


def _vmem_capacity_bytes():
    try:
        return int(pltpu.get_tpu_info().vmem_capacity_bytes)
    except Exception:
        return 64 * 1024 * 1024  # v7x per-TC physical VMEM; safe lower bound


def _choose_tiles(n, cap):
    """Pick (row tile TM, contraction tile KC), both multiples of 128."""
    budget = min(cap // 2, 48 * 1024 * 1024)  # <=32 MiB on v7x, <=48 MiB v5e/v6e
    m128 = _round_up(n, 128)

    tm = min(512, m128)
    if m128 >= 256:
        # Keep >= 2 row tiles so dimension_semantics=("parallel", ...) actually
        # splits the A stream across v7x's two TensorCores.
        tm = min(tm, max(128, (m128 // 2) // 128 * 128))

    # Footprint per step ~= 2x double-buffered int8 A^T tile + bf16 cast temp
    # (+ tiny y2 / acc / dinv / out buffers)  ~= 4 * KC * TM bytes.
    kc_budget = max(128, (budget // (4 * tm)) // 128 * 128)
    kc = min(_round_up(n, 128), kc_budget, 4096)
    return tm, kc


def _vmem_limit_bytes(tm, kc, cap):
    est = (2 * kc * tm          # double-buffered int8 A^T tiles
           + 2 * kc * tm        # bf16 cast temporary (conservative: one tile)
           + 2 * 2 * kc * 2     # double-buffered y2 (bf16 hi/lo rows)
           + 64 * tm)           # acc / dinv / out (sublane-padded) + slack
    return int(min(cap * 3 // 4, max(32 * 1024 * 1024, 2 * est)))


def attention_score_forward(x, edge_index, weight, bias, *, tile_m=None, tile_k=None):
    """score = GCNConv(in_channels, 1)(x, edge_index)   (PSGCN attention_score)."""
    n, c = x.shape
    cap = _vmem_capacity_bytes()

    tm_auto, kc_auto = _choose_tiles(n, cap)
    tm = tile_m if tile_m is not None else tm_auto
    kc = tile_k if tile_k is not None else kc_auto
    assert tm % 128 == 0, "row tile must be a multiple of 128 lanes"
    assert kc % 128 == 0, "contraction tile must be a multiple of 128 (int8 sublanes x lanes)"

    mpad = _round_up(n, tm)   # output-node axis (grid axis 0, padded to the row tile)
    kpad = _round_up(n, kc)   # neighbour axis   (grid axis 1, padded to the K tile)

    # ---- plain-JAX glue: O(E) scatter build of the int8 (A + I)^T counts ----
    src = edge_index[0]
    dst = edge_index[1]
    loops = jnp.arange(n, dtype=edge_index.dtype)
    src_all = jnp.concatenate([src, loops])
    dst_all = jnp.concatenate([dst, loops])

    # (A+I)^T counts in int8: at[k, m] = #edges k->m (+ self loop).  int8 halves
    # the dominant N^2 HBM stream; exact for edge multiplicity <= 127.
    at_counts = jnp.zeros((kpad, mpad), jnp.int8).at[src_all, dst_all].add(
        jnp.ones_like(src_all, dtype=jnp.int8))

    deg = jnp.zeros((n,), jnp.float32).at[dst_all].add(1.0)
    dinv = jnp.where(deg > 0, jax.lax.rsqrt(deg), 0.0)                  # (n,) f32

    # Hoisted once (not per tile): y = D^{-1/2} (X @ W), tiny [N,C]x[C,1] matvec.
    x_pad = jnp.zeros((kpad, c), x.dtype).at[:n].set(x)
    dinv_k = jnp.zeros((kpad,), jnp.float32).at[:n].set(dinv)
    y = dinv_k * (x_pad @ weight)[:, 0]                                 # (kpad,) f32
    # bf16 hi/lo split: native-bf16 MXU matmul, ~f32 accuracy retained.
    y_hi = y.astype(jnp.bfloat16)
    y_lo = (y - y_hi.astype(jnp.float32)).astype(jnp.bfloat16)
    y2 = jnp.stack([y_hi, y_lo], axis=0)                                # (2, kpad) bf16

    dinv_m = jnp.zeros((1, mpad), jnp.float32).at[0, :n].set(dinv)      # lane-dense

    grid = (mpad // tm, kpad // kc)
    cost = pl.CostEstimate(
        flops=2 * 2 * kpad * mpad,                 # two LHS rows (hi/lo)
        transcendentals=0,
        bytes_accessed=kpad * mpad + 2 * 2 * kpad + 4 * mpad + 4 * mpad,
    )

    out = pl.pallas_call(
        gcn_score_kernel,
        out_shape=jax.ShapeDtypeStruct((1, mpad), jnp.float32),
        grid=grid,
        in_specs=[
            pl.BlockSpec((kc, tm), lambda i, k: (k, i)),   # streamed int8 (A+I)^T tile
            pl.BlockSpec((2, kc), lambda i, k: (0, k)),    # bf16 hi/lo y, lane-dense
            pl.BlockSpec((1, tm), lambda i, k: (0, i)),    # per-row D^{-1/2}, lane-dense
            pl.BlockSpec(memory_space=pltpu.SMEM),         # bias [1]
        ],
        out_specs=pl.BlockSpec((1, tm), lambda i, k: (0, i)),
        scratch_shapes=[pltpu.VMEM((1, tm), jnp.float32)],
        compiler_params=pltpu.CompilerParams(
            dimension_semantics=("parallel", "arbitrary"),
            vmem_limit_bytes=_vmem_limit_bytes(tm, kc, cap),
        ),
        cost_estimate=cost,
    )(at_counts, y2, dinv_m, bias)
    return out[0, :n][:, None]


def reference_forward(x, edge_index, weight, bias):
    """Pure-JAX f32 reference: A_hat @ (X @ W) + b with A_hat = D^-1/2 (A+I) D^-1/2."""
    n = x.shape[0]
    src, dst = edge_index[0], edge_index[1]
    loops = jnp.arange(n, dtype=edge_index.dtype)
    src = jnp.concatenate([src, loops])
    dst = jnp.concatenate([dst, loops])
    a = jnp.zeros((n, n), jnp.float32).at[dst, src].add(1.0)
    deg = a.sum(axis=1)
    dinv = jnp.where(deg > 0, 1.0 / jnp.sqrt(deg), 0.0)
    a_hat = dinv[:, None] * a * dinv[None, :]
    return a_hat @ (x @ weight) + bias[0]


if __name__ == "__main__":
    key = jax.random.PRNGKey(0)
    k_x, k_w, k_e = jax.random.split(key, 3)

    num_nodes = 200          # not a multiple of 128 -> exercises row/col padding
    in_channels = 32
    num_edges = 600

    x = jax.random.normal(k_x, (num_nodes, in_channels), dtype=jnp.float32)

    # Deterministic Glorot-style init for GCNConv(in_channels, 1) weight + bias.
    limit = (6.0 / (in_channels + 1)) ** 0.5
    weight = jax.random.uniform(
        k_w, (in_channels, 1), minval=-limit, maxval=limit, dtype=jnp.float32
    )
    bias = jnp.array([0.1], jnp.float32)

    edge_index = jax.random.randint(
        k_e, (2, num_edges), minval=0, maxval=num_nodes, dtype=jnp.int32
    )

    # tile_m=tile_k=128 forces a (2, 2) grid at this small N so both the
    # "parallel" row axis and the "arbitrary" k-accumulation axis are exercised.
    score = attention_score_forward(x, edge_index, weight, bias,
                                    tile_m=128, tile_k=128)
    jax.block_until_ready(score)

    ref = reference_forward(x, edge_index, weight, bias)
    assert score.shape == (num_nodes, 1)
    max_err = float(jnp.max(jnp.abs(score - ref)))
    assert jnp.allclose(score, ref, atol=2e-4, rtol=2e-4), max_err

    print("KERNEL_OK")
</pallas_src>

<mosaic_0001>
module attributes {stable_mosaic.version = 11 : i64} {
  func.func @gcn_score_kernel(%arg0: i32, %arg1: i32, %arg2: memref<128x128xi8, #tpu.memory_space<vmem>>, %arg3: memref<2x128xbf16, #tpu.memory_space<vmem>>, %arg4: memref<1x128xf32, #tpu.memory_space<vmem>>, %arg5: memref<1xf32, #tpu.memory_space<smem>>, %arg6: memref<1x128xf32, #tpu.memory_space<vmem>>, %arg7: memref<1x128xf32, #tpu.memory_space<vmem>>) attributes {dimension_semantics = [#tpu.dimension_semantics<parallel>, #tpu.dimension_semantics<arbitrary>], iteration_bounds = array<i64: 2, 2>, scalar_prefetch = 0 : i64, scratch_operands = 1 : i64, tpu.core_type = #tpu.core_type<tc>, window_params = [{transform_indices = @transform_0, window_bounds = array<i64: 128, 128>}, {transform_indices = @transform_1, window_bounds = array<i64: 2, 128>}, {transform_indices = @transform_2, window_bounds = array<i64: 1, 128>}, {transform_indices = @transform_3, window_bounds = array<i64: 1>}, {transform_indices = @transform_4, window_bounds = array<i64: 1, 128>}]} {
    %c0_i32 = arith.constant 0 : i32
    %0 = arith.cmpi eq, %arg1, %c0_i32 : i32
    %1 = arith.extui %0 : i1 to i32
    %c0_i32_0 = arith.constant 0 : i32
    %2 = arith.cmpi ne, %1, %c0_i32_0 : i32
    scf.if %2 {
      %cst_9 = arith.constant 0.000000e+00 : f32
      %16 = vector.broadcast %cst_9 : f32 to vector<1x128xf32>
      %c0_10 = arith.constant 0 : index
      %c0_11 = arith.constant 0 : index
      %17 = vector.load %arg7[%c0_10, %c0_11] : memref<1x128xf32, #tpu.memory_space<vmem>>, vector<1x128xf32>
      tpu.vector_store %arg7[%c0_10, %c0_11], %16 {strides = array<i32>} : memref<1x128xf32, #tpu.memory_space<vmem>>, vector<1x128xf32>,
    } else {
    }
    %c0 = arith.constant 0 : index
    %c0_1 = arith.constant 0 : index
    %3 = vector.load %arg2[%c0, %c0_1] : memref<128x128xi8, #tpu.memory_space<vmem>>, vector<128x128xi8>
    %4 = arith.sitofp %3 : vector<128x128xi8> to vector<128x128xbf16>
    %c0_2 = arith.constant 0 : index
    %c0_3 = arith.constant 0 : index
    %5 = vector.load %arg3[%c0_2, %c0_3] : memref<2x128xbf16, #tpu.memory_space<vmem>>, vector<2x128xbf16>
    %cst = arith.constant dense<0.000000e+00> : vector<2x128xf32>
    %6 = tpu.matmul %5, %4, %cst {dimension_numbers = #tpu.dot_dimension_numbers<[1], [0], [0], [1], [0, 0, 1, 1], [], []>} : vector<2x128xbf16>, vector<128x128xbf16>, vector<2x128xf32> -> vector<2x128xf32>
    %c0_4 = arith.constant 0 : index
    %c0_5 = arith.constant 0 : index
    %7 = vector.load %arg7[%c0_4, %c0_5] : memref<1x128xf32, #tpu.memory_space<vmem>>, vector<1x128xf32>
    %8 = vector.extract_strided_slice %6 {offsets = [0, 0], sizes = [1, 128], strides = [1, 1]} : vector<2x128xf32> to vector<1x128xf32>
    %9 = vector.extract_strided_slice %6 {offsets = [1, 0], sizes = [1, 128], strides = [1, 1]} : vector<2x128xf32> to vector<1x128xf32>
    %10 = arith.addf %8, %9 : vector<1x128xf32>
    %11 = arith.addf %7, %10 : vector<1x128xf32>
    %c0_6 = arith.constant 0 : index
    %c0_7 = arith.constant 0 : index
    %12 = vector.load %arg7[%c0_6, %c0_7] : memref<1x128xf32, #tpu.memory_space<vmem>>, vector<1x128xf32>
    tpu.vector_store %arg7[%c0_6, %c0_7], %11 {strides = array<i32>} : memref<1x128xf32, #tpu.memory_space<vmem>>, vector<1x128xf32>,
    %c1_i32 = arith.constant 1 : i32
    %13 = arith.cmpi eq, %arg1, %c1_i32 : i32
    %14 = arith.extui %13 : i1 to i32
    %c0_i32_8 = arith.constant 0 : i32
    %15 = arith.cmpi ne, %14, %c0_i32_8 : i32
    scf.if %15 {
      %c0_9 = arith.constant 0 : index
      %c0_10 = arith.constant 0 : index
      %16 = vector.load %arg4[%c0_9, %c0_10] : memref<1x128xf32, #tpu.memory_space<vmem>>, vector<1x128xf32>
      %c0_11 = arith.constant 0 : index
      %c0_12 = arith.constant 0 : index
      %17 = vector.load %arg7[%c0_11, %c0_12] : memref<1x128xf32, #tpu.memory_space<vmem>>, vector<1x128xf32>
      %18 = arith.mulf %16, %17 : vector<1x128xf32>
      %c0_13 = arith.constant 0 : index
      %19 = memref.load %arg5[%c0_13] : memref<1xf32, #tpu.memory_space<smem>>
      %20 = vector.broadcast %19 : f32 to vector<1x128xf32>
      %21 = arith.addf %18, %20 : vector<1x128xf32>
      %c0_14 = arith.constant 0 : index
      %c0_15 = arith.constant 0 : index
      %22 = vector.load %arg6[%c0_14, %c0_15] : memref<1x128xf32, #tpu.memory_space<vmem>>, vector<1x128xf32>
      tpu.vector_store %arg6[%c0_14, %c0_15], %21 {strides = array<i32>} : memref<1x128xf32, #tpu.memory_space<vmem>>, vector<1x128xf32>,
    } else {
    }
    return
  }
  func.func @transform_0(%arg0: i32, %arg1: i32) -> (i32, i32) {
    %c0_i32 = arith.constant 0 : i32
    return %arg1, %arg0 : i32, i32
  }
  func.func @transform_1(%arg0: i32, %arg1: i32) -> (i32, i32) {
    %c0_i32 = arith.constant 0 : i32
    %c0_i32_0 = arith.constant 0 : i32
    return %c0_i32, %arg1 : i32, i32
  }
  func.func @transform_2(%arg0: i32, %arg1: i32) -> (i32, i32) {
    %c0_i32 = arith.constant 0 : i32
    %c0_i32_0 = arith.constant 0 : i32
    return %c0_i32, %arg0 : i32, i32
  }
  func.func @transform_3(%arg0: i32, %arg1: i32) -> i32 {
    %c0_i32 = arith.constant 0 : i32
    %c0_i32_0 = arith.constant 0 : i32
    return %c0_i32 : i32
  }
  func.func @transform_4(%arg0: i32, %arg1: i32) -> (i32, i32) {
    %c0_i32 = arith.constant 0 : i32
    %c0_i32_0 = arith.constant 0 : i32
    return %c0_i32, %arg0 : i32, i32
  }
}

</mosaic_0001>

<llo_original>
// kernel: tpu_custom_call.1
$region0: #{tpu_custom_call.1}
  #allocation0 [shape = 'u32[]', space=smem, size = 0x4, offset = 0x4, fixed_abs, tag = 'smem constant byte address 0x4 - core index']
  #allocation1 [shape = 'u32[72,128]{1,0:T(1,128)}', space=vmem, size = 0x9000, scoped, tag = 'internal scratch']
  #allocation2 [shape = 'f32[1,128]{1,0:T(1,128)}', space=vmem, size = 0x200, scoped, tag = 'scratch operand']
  #allocation3 [shape = 'f32[1]{0:T(128)S(6)}', space=smem, size = 0x200, scoped, tag = 'scoped memory for tpu_custom_call.1']
  %s0 = inlined_call_operand.hbm [shape: s8[256,256], index: 0, kind: input, shape index: {}]
  %s1 = inlined_call_operand.vmem [shape: bf16[2,256], index: 1, kind: input, shape index: {}]
  %s2 = inlined_call_operand.hbm [shape: f32[1,256], index: 2, kind: input, shape index: {}]
  %s3 = inlined_call_operand.<no memory space> [shape: f32[1], index: 3, kind: input, shape index: {}]
  %s4 = inlined_call_operand.hbm [shape: f32[1,256], index: 4, kind: output, shape index: {}]
  %s5 = sld [smem:[#allocation0]]
  $region65: #{tpu_custom_call.1} parent=0
    _
  %s7 = ssub.s32 1, %s5
  %s8 = scalar_select 0, %s7, %s5
  %9 = sst [smem:[#allocation3]] %s3
  $region1: #{tpu_custom_call.1} parent=0
    #allocation4 [shape = 'u8[32768]{0}', space=vmem, size = 0x8000, scoped, tag = 'input window, operand 0']
    #allocation5 [shape = 's32[2]{0}', space=sflag, size = 0x8, scoped, tag = 'scoped memory for tpu_custom_call.1']
    #allocation6 [shape = 's32[2]{0}', space=sflag, size = 0x8, scoped, tag = 'scoped memory for tpu_custom_call.1']
    #allocation7 [shape = 'u8[1024]{0}', space=vmem, size = 0x400, scoped, tag = 'input window, operand 2']
    #allocation8 [shape = 's32[2]{0}', space=sflag, size = 0x8, scoped, tag = 'scoped memory for tpu_custom_call.1']
    #allocation9 [shape = 'u8[1024]{0}', space=vmem, size = 0x400, scoped, tag = 'output window, operand 0']
    %10 = vsyncpa [#allocation5], 0
    %s11 = scalar_lea.sflag [#allocation5], 1
    %12 = vsyncpa %s11, 0
    %13 = vsyncpa [#allocation8], 0
    %s14 = scalar_lea.sflag [#allocation8], 1
    %15 = vsyncpa %s14, 0
    %16 = vsyncpa [#allocation6], 0
    %s17 = scalar_lea.sflag [#allocation6], 1
    %18 = vsyncpa %s17, 0
    loop: start=0, step=1, limit=6
    $region2: #{tpu_custom_call.1} parent=1 // loop_pre_header
      _
    $region3: #{tpu_custom_call.1} parent=1 // loop_header
      %s20 = sphi 0, %s24
      %p21 = scmp.ge.s32.totalorder %s20, 6
      %s27 = sphi 0, %s39
      %s28 = sphi 0, %s35
      %s29 = sphi 0, %s27
      %s30 = sphi 0, %s28
      %s31 = sphi 0, %s29
      %s32 = sphi 0, %s30
      %s44 = sphi 0, %s46
      %s47 = sphi 0, %s44
      %s48 = sphi 0, %s47
      %s64 = sphi 0, %s48
      %s70 = sphi 0, %s72
      %s73 = sphi 0, %s70
      %s74 = sphi 0, %s73
      %s90 = sphi 0, %s74
      %s96 = sphi 0, %s98
      %s99 = sphi 0, %s96
      %s100 = sphi 0, %s99
      %s116 = sphi 0, %s100
      %s120 = sphi 0, %s120
      %s122 = sphi 0, %s120
      %s123 = sphi 0, %s122
      %s137 = sphi 0, %s123
      %s143 = sphi 0, %s145
      %s146 = sphi 0, %s143
      %s147 = sphi 0, %s146
      %s163 = sphi 0, %s147
    $region4: #{tpu_custom_call.1} parent=1 // loop_header_branch
      %23 = sbr.rel (%p21) target = $region8
    $region5: #{tpu_custom_call.1} parent=1 // loop_body
      %s25 = ssub.s32 %s20, 1
      %s26 = ssub.s32 %s20, 2
      %s33 = sadd.s32 1, %s28
      %p34 = scmp.ge.s32.totalorder %s33, 2
      %s35 = scalar_select %p34, 0, %s33
      %s36 = sadd.s32 1, %s27
      %s37 = scalar_select %p34, %s36, %s27
      %p38 = scmp.ge.s32.totalorder %s37, 2
      %s39 = scalar_select %p38, 0, %s37
      %s40 = ssub.s32 %s28, %s35
      %s41 = ssub.s32 %s27, %s39
      %s42 = sor.u32 %s40, %s41
      %p43 = scmp.eq.s32.totalorder %s42, 0
      %s45 = sadd.s32 %s44, 1
      %s46 = scalar_select %p43, %s44, %s45
      %p49 = pneg %p43
      %p50 = scmp.eq.s32.totalorder %s20, 3
      %p51 = por %p49, %p50
      %p52 = scmp.ne.s32.totalorder %s44, %s47
      %p53 = scmp.eq.s32.totalorder %s20, 0
      %p54 = por %p52, %p53
      %p55 = scmp.ne.s32.totalorder %s44, %s47
      %p56 = scmp.eq.s32.totalorder %s25, 3
      %p57 = por %p55, %p56
      %p58 = scmp.ne.s32.totalorder %s47, %s48
      %p59 = scmp.eq.s32.totalorder %s25, 0
      %p60 = por %p58, %p59
      %p61 = scmp.ne.s32.totalorder %s47, %s48
      %p62 = scmp.eq.s32.totalorder %s26, 3
      %p63 = por %p61, %p62
      %p65 = scmp.ne.s32.totalorder %s48, %s64
      %p66 = scmp.eq.s32.totalorder %s26, 0
      %p67 = por %p65, %p66
      %s68 = ssub.s32 %s28, %s35
      %p69 = scmp.eq.s32.totalorder %s68, 0
      %s71 = sadd.s32 %s70, 1
      %s72 = scalar_select %p69, %s70, %s71
      %p75 = pneg %p69
      %p76 = scmp.eq.s32.totalorder %s20, 3
      %p77 = por %p75, %p76
      %p78 = scmp.ne.s32.totalorder %s70, %s73
      %p79 = scmp.eq.s32.totalorder %s20, 0
      %p80 = por %p78, %p79
      %p81 = scmp.ne.s32.totalorder %s70, %s73
      %p82 = scmp.eq.s32.totalorder %s25, 3
      %p83 = por %p81, %p82
      %p84 = scmp.ne.s32.totalorder %s73, %s74
      %p85 = scmp.eq.s32.totalorder %s25, 0
      %p86 = por %p84, %p85
      %p87 = scmp.ne.s32.totalorder %s73, %s74
      %p88 = scmp.eq.s32.totalorder %s26, 3
      %p89 = por %p87, %p88
      %p91 = scmp.ne.s32.totalorder %s74, %s90
      %p92 = scmp.eq.s32.totalorder %s26, 0
      %p93 = por %p91, %p92
      %s94 = ssub.s32 %s27, %s39
      %p95 = scmp.eq.s32.totalorder %s94, 0
      %s97 = sadd.s32 %s96, 1
      %s98 = scalar_select %p95, %s96, %s97
      %p101 = pneg %p95
      %p102 = scmp.eq.s32.totalorder %s20, 3
      %p103 = por %p101, %p102
      %p104 = scmp.ne.s32.totalorder %s96, %s99
      %p105 = scmp.eq.s32.totalorder %s20, 0
      %p106 = por %p104, %p105
      %p107 = scmp.ne.s32.totalorder %s96, %s99
      %p108 = scmp.eq.s32.totalorder %s25, 3
      %p109 = por %p107, %p108
      %p110 = scmp.ne.s32.totalorder %s99, %s100
      %p111 = scmp.eq.s32.totalorder %s25, 0
      %p112 = por %p110, %p111
      %p113 = scmp.ne.s32.totalorder %s99, %s100
      %p114 = scmp.eq.s32.totalorder %s26, 3
      %p115 = por %p113, %p114
      %p117 = scmp.ne.s32.totalorder %s100, %s116
      %p118 = scmp.eq.s32.totalorder %s26, 0
      %p119 = por %p117, %p118
      %s121 = sadd.s32 %s120, 1
      %p124 = scmp.eq.s32.totalorder %s20, 3
      %p125 = scmp.ne.s32.totalorder %s120, %s122
      %p126 = scmp.eq.s32.totalorder %s20, 0
      %p127 = por %p125, %p126
      %p128 = scmp.ne.s32.totalorder %s120, %s122
      %p129 = scmp.eq.s32.totalorder %s25, 3
      %p130 = por %p128, %p129
      %p131 = scmp.ne.s32.totalorder %s122, %s123
      %p132 = scmp.eq.s32.totalorder %s25, 0
      %p133 = por %p131, %p132
      %p134 = scmp.ne.s32.totalorder %s122, %s123
      %p135 = scmp.eq.s32.totalorder %s26, 3
      %p136 = por %p134, %p135
      %p138 = scmp.ne.s32.totalorder %s123, %s137
      %p139 = scmp.eq.s32.totalorder %s26, 0
      %p140 = por %p138, %p139
      %s141 = ssub.s32 %s27, %s39
      %p142 = scmp.eq.s32.totalorder %s141, 0
      %s144 = sadd.s32 %s143, 1
      %s145 = scalar_select %p142, %s143, %s144
      %p148 = pneg %p142
      %p149 = scmp.eq.s32.totalorder %s20, 3
      %p150 = por %p148, %p149
      %p151 = scmp.ne.s32.totalorder %s143, %s146
      %p152 = scmp.eq.s32.totalorder %s20, 0
      %p153 = por %p151, %p152
      %p154 = scmp.ne.s32.totalorder %s143, %s146
      %p155 = scmp.eq.s32.totalorder %s25, 3
      %p156 = por %p154, %p155
      %p157 = scmp.ne.s32.totalorder %s146, %s147
      %p158 = scmp.eq.s32.totalorder %s25, 0
      %p159 = por %p157, %p158
      %p160 = scmp.ne.s32.totalorder %s146, %s147
      %p161 = scmp.eq.s32.totalorder %s26, 3
      %p162 = por %p160, %p161
      %p164 = scmp.ne.s32.totalorder %s147, %s163
      %p165 = scmp.eq.s32.totalorder %s26, 0
      %p166 = por %p164, %p165
      %p167 = scmp.le.s32.totalorder 1, %s20
      %p168 = scmp.lt.s32.totalorder %s20, 5
      %p169 = pnand %p167, %p168
      %p170 = pneg %p169
      // Predicated region
      $region9: #{tpu_custom_call.1} parent=5 // pred_check
        _
      $region10: #{tpu_custom_call.1} parent=5 // pred_check_branch
        %172 = sbr.rel (%p169) target = $region12
      $region11: #{tpu_custom_call.1} parent=5 // pred_region
        %s173 = ssub.s32 %s20, 1
        // Predicated region
        $region13: #{tpu_custom_call.1} parent=11 // pred_check
          %p174 = pneg %p133
        $region14: #{tpu_custom_call.1} parent=11 // pred_check_branch
          %176 = sbr.rel (%p174) target = $region16
        $region15: #{tpu_custom_call.1} parent=11 // pred_region
          _
        $region16: #{tpu_custom_call.1} parent=11 // pred_fallthru
          _
      $region12: #{tpu_custom_call.1} parent=5 // pred_fallthru
        _
      %p177 = scmp.lt.s32.totalorder %s20, 4
      // Predicated region
      $region17: #{tpu_custom_call.1} parent=5 // pred_check
        %p178 = pneg %p177
      $region18: #{tpu_custom_call.1} parent=5 // pred_check_branch
        %180 = sbr.rel (%p178) target = $region20
      $region19: #{tpu_custom_call.1} parent=5 // pred_region
        // Predicated region
        $region21: #{tpu_custom_call.1} parent=19 // pred_check
          %p181 = pneg %p54
        $region22: #{tpu_custom_call.1} parent=19 // pred_check_branch
          %183 = sbr.rel (%p181) target = $region24
        $region23: #{tpu_custom_call.1} parent=19 // pred_region
          %s184 = sand.u32 %s44, 1
          %s185 = scalar_lea.sflag [#allocation5], %s184
          %s186 = sand.u32 %s44, 1
          %s187 = smul.addr %s186, 32
          %s188 = scalar_lea.vmem [#allocation4], %s187
          %s189 = smul.u32 4, %s28
          %191 = vsyncadd %s185, 0
          %s192 = smul.addr %s189, 2
          %s193 = sadd.s32 %s27, %s192
          %s194 = smul.addr %s193, 8
          %s195 = scalar_lea.hbm %s0, %s194
          %s196 = sshll.u32 %s195, 4
          %s197 = int_to_ptr.hbm [resolvable:$true] %s196
          %s198 = sshll.u32 %s188, 4
          %s199 = int_to_ptr.vmem [resolvable:$true] %s198
          %204 = dma.hbm_to_vmem [thread:$0]  %s197, 512, %s199, %s185, 256, 128, 8
        $region24: #{tpu_custom_call.1} parent=19 // pred_fallthru
          _
        // Predicated region
        $region25: #{tpu_custom_call.1} parent=19 // pred_check
          %p205 = pneg %p80
        $region26: #{tpu_custom_call.1} parent=19 // pred_check_branch
          %207 = sbr.rel (%p205) target = $region28
        $region27: #{tpu_custom_call.1} parent=19 // pred_region
          %p208 = scmp.lt.s32.totalorder %s28, 1
          %s209 = scalar_select %p208, %s28, 1
          %s210 = scalar_lea.vmem %s1, %s209
        $region28: #{tpu_custom_call.1} parent=19 // pred_fallthru
          _
        // Predicated region
        $region29: #{tpu_custom_call.1} parent=19 // pred_check
          %p211 = pneg %p106
        $region30: #{tpu_custom_call.1} parent=19 // pred_check_branch
          %213 = sbr.rel (%p211) target = $region32
        $region31: #{tpu_custom_call.1} parent=19 // pred_region
          %s214 = sand.u32 %s96, 1
          %s215 = scalar_lea.sflag [#allocation8], %s214
          %s216 = sand.u32 %s96, 1
          %s217 = scalar_lea.vmem [#allocation7], %s216
          %219 = vsyncadd %s215, 0
          %s220 = scalar_lea.hbm %s2, %s27
          %s222 = sshll.u32 %s220, 4
          %s223 = int_to_ptr.hbm [resolvable:$true] %s222
          %s224 = sshll.u32 %s217, 4
          %s225 = int_to_ptr.vmem [resolvable:$true] %s224
          %227 = dma.hbm_to_vmem [thread:$0]  %s223, 16, %s225, %s215
        $region32: #{tpu_custom_call.1} parent=19 // pred_fallthru
          _
      $region20: #{tpu_custom_call.1} parent=5 // pred_fallthru
        _
      %p228 = scmp.le.s32.totalorder 1, %s20
      %p229 = scmp.lt.s32.totalorder %s20, 5
      %p230 = pnand %p228, %p229
      %p231 = pneg %p230
      // Predicated region
      $region33: #{tpu_custom_call.1} parent=5 // pred_check
        _
      $region34: #{tpu_custom_call.1} parent=5 // pred_check_branch
        %233 = sbr.rel (%p230) target = $region36
      $region35: #{tpu_custom_call.1} parent=5 // pred_region
        %s234 = ssub.s32 %s20, 1
        %s235 = sand.u32 %s47, 1
        %s236 = scalar_lea.sflag [#allocation5], %s235
        %s237 = sand.u32 %s47, 1
        %s238 = smul.addr %s237, 32
        %s239 = scalar_lea.vmem [#allocation4], %s238
        // Predicated region
        $region37: #{tpu_custom_call.1} parent=35 // pred_check
          %p240 = pneg %p60
        $region38: #{tpu_custom_call.1} parent=35 // pred_check_branch
          %242 = sbr.rel (%p240) target = $region40
        $region39: #{tpu_custom_call.1} parent=35 // pred_region
          %244 = dma.done %s236, 512
        $region40: #{tpu_custom_call.1} parent=35 // pred_fallthru
          _
        %s245 = sand.u32 %s99, 1
        %s246 = scalar_lea.sflag [#allocation8], %s245
        %s247 = sand.u32 %s99, 1
        %s248 = scalar_lea.vmem [#allocation7], %s247
        // Predicated region
        $region41: #{tpu_custom_call.1} parent=35 // pred_check
          %p249 = pneg %p112
        $region42: #{tpu_custom_call.1} parent=35 // pred_check_branch
          %251 = sbr.rel (%p249) target = $region44
        $region43: #{tpu_custom_call.1} parent=35 // pred_region
          %253 = dma.done %s246, 16
        $region44: #{tpu_custom_call.1} parent=35 // pred_fallthru
          _
        %s254 = sand.u32 %s47, 1
        %s255 = scalar_lea.sflag [#allocation5], %s254
        %s256 = sand.u32 %s47, 1
        %s257 = smul.addr %s256, 32
        %s258 = scalar_lea.vmem [#allocation4], %s257
        %p259 = pneg %p60
        %p260 = pneg %p57
        %p261 = scmp.lt.s32.totalorder %s30, 1
        %s262 = scalar_select %p261, %s30, 1
        %s263 = scalar_lea.vmem %s1, %s262
        %p264 = pneg %p86
        %p265 = pneg %p83
        %s266 = sand.u32 %s99, 1
        %s267 = scalar_lea.sflag [#allocation8], %s266
        %s268 = sand.u32 %s99, 1
        %s269 = scalar_lea.vmem [#allocation7], %s268
        %p270 = pneg %p112
        %p271 = pneg %p109
        %p272 = pneg %p133
        %p273 = pneg %p130
        %p274 = pneg %p159
        %p275 = pneg %p156
        %s276 = sand.u32 %s146, 1
        %s277 = scalar_lea.sflag [#allocation6], %s276
        %s278 = sand.u32 %s146, 1
        %s279 = scalar_lea.vmem [#allocation9], %s278
        %s280 = smul.u32 4, %s30
        %p281 = scmp.lt.s32.totalorder %s30, 1
        %s282 = scalar_select %p281, %s30, 1
        %s283 = scalar_lea.vmem %s1, %s282
        %p284 = scmp.eq.s32.totalorder %s30, 0
        // Predicated region
        $region45: #{tpu_custom_call.1} parent=35 // pred_check
          %p285 = pneg %p284
        $region46: #{tpu_custom_call.1} parent=35 // pred_check_branch
          %287 = sbr.rel (%p285) target = $region48
        $region47: #{tpu_custom_call.1} parent=35 // pred_region
          %288 = vst [vmem:[#allocation2] sm:$0x1] 0.0
        $region48: #{tpu_custom_call.1} parent=35 // pred_fallthru
          _
        %v289 = vld [vmem:[%s239] sm:$0xff]
        %v290 = vld [vmem:[%s239 + $0x8] sm:$0xff]
        %v291 = vld [vmem:[%s239 + $0x10] sm:$0xff]
        %v292 = vld [vmem:[%s239 + $0x18] sm:$0xff]
        %v293 = vunpack.c.0.s8 %v289
        %v294 = vunpack.c.1.s8 %v289
        %v295 = vunpack.c.2.s8 %v289
        %v296 = vunpack.c.3.s8 %v289
        %v297 = vunpack.c.0.s8 %v290
        %v298 = vunpack.c.1.s8 %v290
        %v299 = vunpack.c.2.s8 %v290
        %v300 = vunpack.c.3.s8 %v290
        %v301 = vunpack.c.0.s8 %v291
        %v302 = vunpack.c.1.s8 %v291
        %v303 = vunpack.c.2.s8 %v291
        %v304 = vunpack.c.3.s8 %v291
        %v305 = vunpack.c.0.s8 %v292
        %v306 = vunpack.c.1.s8 %v292
        %v307 = vunpack.c.2.s8 %v292
        %v308 = vunpack.c.3.s8 %v292
        %v309 = vcvt.s32.f32 %v293
        %v310 = vcvt.s32.f32 %v294
        %v311 = vcvt.s32.f32 %v295
        %v312 = vcvt.s32.f32 %v296
        %v313 = vcvt.s32.f32 %v297
        %v314 = vcvt.s32.f32 %v298
        %v315 = vcvt.s32.f32 %v299
        %v316 = vcvt.s32.f32 %v300
        %v317 = vcvt.s32.f32 %v301
        %v318 = vcvt.s32.f32 %v302
        %v319 = vcvt.s32.f32 %v303
        %v320 = vcvt.s32.f32 %v304
        %v321 = vcvt.s32.f32 %v305
        %v322 = vcvt.s32.f32 %v306
        %v323 = vcvt.s32.f32 %v307
        %v324 = vcvt.s32.f32 %v308
        %v325 = vpack.c.bf16 %v310, %v309
        %v326 = vpack.c.bf16 %v312, %v311
        %v327 = vpack.c.bf16 %v314, %v313
        %v328 = vpack.c.bf16 %v316, %v315
        %v329 = vpack.c.bf16 %v318, %v317
        %v330 = vpack.c.bf16 %v320, %v319
        %v331 = vpack.c.bf16 %v322, %v321
        %v332 = vpack.c.bf16 %v324, %v323
        %v333 = vld [vmem:[%s283] sm:$0x1]
        %334 = vmatpush.bf16.msra.mxu0 %v332
        %335 = vmatpush.bf16.msra.mxu0 %v331
        %336 = vmatpush.bf16.msra.mxu0 %v330
        %337 = vmatpush.bf16.msra.mxu0 %v329
        %338 = vmatpush.bf16.msra.mxu0 %v328
        %339 = vmatpush.bf16.msra.mxu0 %v327
        %340 = vmatpush.bf16.msra.mxu0 %v326
        %341 = vmatpush.bf16.msra.mxu0 %v325
        %342 = vmatmul.bf16.gmra.mxu0 %v333
        %v343 = vpop.f32.mrf.mxu0
        %v344 = vadd.f32 0.0, %v343
        %v345 = vpop.f32.mrf.mxu0
        %346 = vdwg.mxu0
        %v347 = vld [vmem:[#allocation2] sm:$0x1]
        %v349 = vrot.slane %v344, 1
        %v351 = vadd.f32 %v344, %v349
        %v352 = vadd.f32 %v347, %v351
        %353 = vst [vmem:[#allocation2] sm:$0x1] %v352
        %p354 = scmp.eq.s32.totalorder %s30, 1
        // Predicated region
        $region49: #{tpu_custom_call.1} parent=35 // pred_check
          %p355 = pneg %p354
        $region50: #{tpu_custom_call.1} parent=35 // pred_check_branch
          %357 = sbr.rel (%p355) target = $region52
        $region51: #{tpu_custom_call.1} parent=35 // pred_region
          %v358 = vld [vmem:[%s248] sm:$0x1]
          %v359 = vld [vmem:[#allocation2] sm:$0x1]
          %v360 = vmul.f32 %v358, %v359
          %s361 = sld [smem:[#allocation3]]
          %v362 = vstv %s361
          %v363 = vadd.f32 %v360, %v362
          %364 = vst [vmem:[%s279] sm:$0x1] %v363
        $region52: #{tpu_custom_call.1} parent=35 // pred_fallthru
          _
        %s365 = sand.u32 %s146, 1
        %s366 = scalar_lea.sflag [#allocation6], %s365
        %s367 = sand.u32 %s146, 1
        %s368 = scalar_lea.vmem [#allocation9], %s367
        // Predicated region
        $region53: #{tpu_custom_call.1} parent=35 // pred_check
          %p369 = pneg %p156
        $region54: #{tpu_custom_call.1} parent=35 // pred_check_branch
          %371 = sbr.rel (%p369) target = $region56
        $region55: #{tpu_custom_call.1} parent=35 // pred_region
          %373 = vsyncadd %s366, 0
          %s374 = scalar_lea.hbm %s4, %s29
          %s376 = sshll.u32 %s368, 4
          %s377 = int_to_ptr.vmem [resolvable:$true] %s376
          %s378 = sshll.u32 %s374, 4
          %s379 = int_to_ptr.hbm [resolvable:$true] %s378
          %381 = dma.vmem_to_hbm [thread:$0]  %s377, 16, %s379, %s366
        $region56: #{tpu_custom_call.1} parent=35 // pred_fallthru
          _
      $region36: #{tpu_custom_call.1} parent=5 // pred_fallthru
        _
      %p382 = scmp.le.s32.totalorder 2, %s20
      // Predicated region
      $region57: #{tpu_custom_call.1} parent=5 // pred_check
        %p383 = pneg %p382
      $region58: #{tpu_custom_call.1} parent=5 // pred_check_branch
        %385 = sbr.rel (%p383) target = $region60
      $region59: #{tpu_custom_call.1} parent=5 // pred_region
        %s386 = ssub.s32 %s20, 2
        // Predicated region
        $region61: #{tpu_custom_call.1} parent=59 // pred_check
          %p387 = pneg %p162
        $region62: #{tpu_custom_call.1} parent=59 // pred_check_branch
          %389 = sbr.rel (%p387) target = $region64
        $region63: #{tpu_custom_call.1} parent=59 // pred_region
          %s390 = sand.u32 %s147, 1
          %s391 = scalar_lea.sflag [#allocation6], %s390
          %s392 = sand.u32 %s147, 1
          %s393 = scalar_lea.vmem [#allocation9], %s392
          %395 = dma.done %s391, 16
        $region64: #{tpu_custom_call.1} parent=59 // pred_fallthru
          _
      $region60: #{tpu_custom_call.1} parent=5 // pred_fallthru
        _
    $region6: #{tpu_custom_call.1} parent=1 // loop_footer
      %s24 = sadd.s32 1, %s20
    $region7: #{tpu_custom_call.1} parent=1 // loop_footer_branch
      %19 = sbr.rel target = $region3
    $region8: #{tpu_custom_call.1} parent=1 // loop_exit
      _
    %396 = vsyncpa [#allocation5], 1
    %s397 = scalar_lea.sflag [#allocation5], 1
    %398 = vsyncpa %s397, 1
    %399 = vsyncpa [#allocation8], 1
    %s400 = scalar_lea.sflag [#allocation8], 1
    %401 = vsyncpa %s400, 1
    %402 = vsyncpa [#allocation6], 1
    %s403 = scalar_lea.sflag [#allocation6], 1
    %404 = vsyncpa %s403, 1

</llo_original>
